<compile_context>
chip_gen: v7x
topology: tpu7x:2x2x1
jax: 0.10.0
libtpu: 0.0.40
codegen_flags: <defaults>
</compile_context>

<pallas_src>
import functools

import jax
import jax.numpy as jnp
from jax import lax
from jax.experimental import pallas as pl
from jax.experimental.pallas import tpu as pltpu


def _dcn_kernel(img_ref, depth_ref, w_ref, b_ref, o_ref, *,
                normalize: bool, chunk: int):
    """Planar 1x1-conv descriptor head + optional per-pixel L2 normalization.

    img_ref:   (1, C_img, TR, L)  VMEM  -- RGB channel planes
    depth_ref: (1, C_dep, TR, L)  VMEM  -- depth channel plane(s)
    w_ref:     (C_in, D)          SMEM  -- 1x1-conv weight (scalar reads)
    b_ref:     (D,)               SMEM  -- bias (scalar reads)
    o_ref:     (1, D, TR, L)      VMEM  -- descriptor planes
    """
    c_img = img_ref.shape[1]
    c_dep = depth_ref.shape[1]
    c_in = c_img + c_dep
    d = o_ref.shape[1]
    tr = img_ref.shape[2]

    # Hoist all SMEM scalar reads (weights + bias) out of the row loop; they
    # are splatted once and reused by every chunk.
    w = [[w_ref[c, j] for j in range(d)] for c in range(c_in)]
    b = [b_ref[j] for j in range(d)]

    def process(row_sl):
        # Load each channel plane for this row-chunk (lane-dense slabs).
        chans = ([img_ref[0, c, row_sl, :] for c in range(c_img)]
                 + [depth_ref[0, c, row_sl, :] for c in range(c_dep)])

        # Unrolled VPU broadcast-FMAs: o[j] = sum_c w[c, j] * x[c] + b[j].
        # (MXU is pointless for a K=4 / N=8 contraction.)
        outs = []
        for j in range(d):
            acc = chans[0] * w[0][j] + b[j]
            for c in range(1, c_in):
                acc = acc + chans[c] * w[c][j]
            outs.append(acc)

        if normalize:
            # NOTE: the PyTorch source divides by a non-keepdim norm tensor (a
            # latent broadcasting bug); we implement the intended semantics:
            # per-pixel L2 normalization over the descriptor dimension.
            sq = outs[0] * outs[0]
            for j in range(1, d):
                sq = sq + outs[j] * outs[j]
            inv = lax.rsqrt(sq + 1e-12)   # EUP; eps guards all-zero pixels
            outs = [r * inv for r in outs]

        for j in range(d):
            v = outs[j]
            if v.dtype != o_ref.dtype:
                v = v.astype(o_ref.dtype)
            o_ref[0, j, row_sl, :] = v

    n_chunks = tr // chunk
    if n_chunks <= 1:
        # Small / ragged tile: single static chunk (no dynamic sublane slice).
        process(slice(None))
    else:
        # Chunked row loop bounds the vreg live set (~30 vregs per chunk).
        def body(i, carry):
            r0 = pl.multiple_of(i * chunk, chunk)
            process(pl.ds(r0, chunk))
            return carry
        lax.fori_loop(0, n_chunks, body, 0, unroll=False)


def _pick_tile(total, target):
    """Largest t <= target dividing `total`, multiple of 8 (or full extent)."""
    t = min(target, total)
    while t > 0:
        if total % t == 0 and (t % 8 == 0 or t == total):
            return t
        t -= 1
    return total   # fallback: the full extent is always a legal block


def _pick_chunk(tr, target=16):
    """Row-chunk size for the in-kernel loop: divides tr, multiple of 8."""
    if tr % 8 != 0 or tr <= target:
        return tr
    c = (min(target, tr) // 8) * 8
    while c >= 8 and tr % c != 0:
        c -= 8
    return c if c >= 8 else tr


def dense_correspondence_forward(img, depth, weight, bias, *,
                                 normalize=True, tile_rows=1024,
                                 out_dtype=jnp.float32):
    """Forward pass.

    img:    [N, 3, H, W]  float32 (NCHW, like PyTorch)
    depth:  [N, 1, H, W]  float32
    weight: [C_in, D]     (C_in = 3 + 1)
    bias:   [D]
    returns [N, D, H, W]  out_dtype
    """
    n, c_img, h, w = img.shape
    c_dep = depth.shape[1]
    c_in = c_img + c_dep
    d = weight.shape[1]
    hw = h * w

    img = img.astype(jnp.float32)
    depth = depth.astype(jnp.float32)
    weight = weight.astype(jnp.float32)
    bias = bias.astype(jnp.float32)

    # Layout: pure (free) reshapes only -- no concat, no pad, no slice copies.
    if hw % 128 == 0:
        rows, lanes = hw // 128, 128          # lane-dense (rows, 128) slabs
    else:
        rows, lanes = h, w                    # native (H, W) tiles; full W is
                                              # a legal last block dim.
    x_img = img.reshape(n, c_img, rows, lanes)
    x_dep = depth.reshape(n, c_dep, rows, lanes)

    out_itemsize = jnp.dtype(out_dtype).itemsize

    # VMEM budget: keep 2x (input + output) blocks under ~20 MiB so the
    # double-buffered pipeline plus compiler scratch fits the explicit 48 MiB
    # limit on every generation (v7x has only 64 MiB physical VMEM).
    bytes_per_row = lanes * (4 * c_in + out_itemsize * d)
    vmem_block_budget = 20 * 1024 * 1024
    max_tr = max(8, vmem_block_budget // (2 * bytes_per_row))
    target = min(tile_rows, max_tr, rows)

    # Megacore (v7x, 2 TCs/chip): make sure the grid has >= 2 parallel steps
    # even when N == 1 by splitting the row axis.
    if n == 1 and rows >= 16:
        target = min(target, max(8, rows // 2))

    tr = _pick_tile(rows, target)
    chunk = _pick_chunk(tr)

    kernel = functools.partial(_dcn_kernel, normalize=normalize, chunk=chunk)

    out = pl.pallas_call(
        kernel,
        out_shape=jax.ShapeDtypeStruct((n, d, rows, lanes), out_dtype),
        grid=(n, rows // tr),
        in_specs=[
            pl.BlockSpec((1, c_img, tr, lanes), lambda b, r: (b, 0, r, 0)),
            pl.BlockSpec((1, c_dep, tr, lanes), lambda b, r: (b, 0, r, 0)),
            pl.BlockSpec(memory_space=pltpu.MemorySpace.SMEM),   # weight
            pl.BlockSpec(memory_space=pltpu.MemorySpace.SMEM),   # bias
        ],
        out_specs=pl.BlockSpec((1, d, tr, lanes), lambda b, r: (b, 0, r, 0)),
        compiler_params=pltpu.CompilerParams(
            dimension_semantics=("parallel", "parallel"),
            vmem_limit_bytes=48 * 1024 * 1024),
    )(x_img, x_dep, weight, bias)

    # Free reshape back to NCHW (rows * lanes == H * W in both layout paths).
    return out.reshape(n, d, h, w)


def _reference(img, depth, weight, bias, normalize=True):
    x = jnp.concatenate([img, depth], axis=1).astype(jnp.float32)  # [N,C,H,W]
    feat = jnp.sum(x[:, :, None] * weight[None, :, :, None, None], axis=1)
    feat = feat + bias[None, :, None, None]                        # [N,D,H,W]
    if normalize:
        sq = jnp.sum(feat * feat, axis=1, keepdims=True)
        feat = feat * jax.lax.rsqrt(sq + 1e-12)
    return feat


if __name__ == "__main__":
    key = jax.random.PRNGKey(0)
    k_img, k_depth, k_w, k_b = jax.random.split(key, 4)

    N, H, W = 2, 16, 16
    C_IMG, C_DEPTH = 3, 1
    DESC_DIM = 8

    img = jax.random.normal(k_img, (N, C_IMG, H, W), dtype=jnp.float32)
    depth = jax.random.normal(k_depth, (N, C_DEPTH, H, W), dtype=jnp.float32)
    weight = jax.random.normal(k_w, (C_IMG + C_DEPTH, DESC_DIM),
                               dtype=jnp.float32) * 0.1
    bias = jax.random.normal(k_b, (DESC_DIM,), dtype=jnp.float32) * 0.01

    out = dense_correspondence_forward(img, depth, weight, bias,
                                       normalize=True)
    out = jax.block_until_ready(out)

    ref = _reference(img, depth, weight, bias, normalize=True)
    assert out.shape == (N, DESC_DIM, H, W), out.shape
    assert jnp.allclose(out, ref, atol=1e-5, rtol=1e-5), \
        float(jnp.max(jnp.abs(out - ref)))

    print("KERNEL_OK")
</pallas_src>

<mosaic_0001>
module attributes {stable_mosaic.version = 11 : i64} {
  func.func @_dcn_kernel(%arg0: i32, %arg1: i32, %arg2: memref<1x3x2x128xf32, #tpu.memory_space<vmem>>, %arg3: memref<1x1x2x128xf32, #tpu.memory_space<vmem>>, %arg4: memref<4x8xf32, #tpu.memory_space<smem>>, %arg5: memref<8xf32, #tpu.memory_space<smem>>, %arg6: memref<1x8x2x128xf32, #tpu.memory_space<vmem>>) attributes {dimension_semantics = [#tpu.dimension_semantics<parallel>, #tpu.dimension_semantics<parallel>], iteration_bounds = array<i64: 2, 1>, scalar_prefetch = 0 : i64, scratch_operands = 0 : i64, tpu.core_type = #tpu.core_type<tc>, window_params = [{transform_indices = @transform_0, window_bounds = array<i64: 1, 3, 2, 128>}, {transform_indices = @transform_1, window_bounds = array<i64: 1, 1, 2, 128>}, {transform_indices = @transform_2, window_bounds = array<i64: 4, 8>}, {transform_indices = @transform_3, window_bounds = array<i64: 8>}, {transform_indices = @transform_4, window_bounds = array<i64: 1, 8, 2, 128>}]} {
    %c0 = arith.constant 0 : index
    %c0_0 = arith.constant 0 : index
    %0 = memref.load %arg4[%c0, %c0_0] : memref<4x8xf32, #tpu.memory_space<smem>>
    %c0_1 = arith.constant 0 : index
    %c1 = arith.constant 1 : index
    %1 = memref.load %arg4[%c0_1, %c1] : memref<4x8xf32, #tpu.memory_space<smem>>
    %c0_2 = arith.constant 0 : index
    %c2 = arith.constant 2 : index
    %2 = memref.load %arg4[%c0_2, %c2] : memref<4x8xf32, #tpu.memory_space<smem>>
    %c0_3 = arith.constant 0 : index
    %c3 = arith.constant 3 : index
    %3 = memref.load %arg4[%c0_3, %c3] : memref<4x8xf32, #tpu.memory_space<smem>>
    %c0_4 = arith.constant 0 : index
    %c4 = arith.constant 4 : index
    %4 = memref.load %arg4[%c0_4, %c4] : memref<4x8xf32, #tpu.memory_space<smem>>
    %c0_5 = arith.constant 0 : index
    %c5 = arith.constant 5 : index
    %5 = memref.load %arg4[%c0_5, %c5] : memref<4x8xf32, #tpu.memory_space<smem>>
    %c0_6 = arith.constant 0 : index
    %c6 = arith.constant 6 : index
    %6 = memref.load %arg4[%c0_6, %c6] : memref<4x8xf32, #tpu.memory_space<smem>>
    %c0_7 = arith.constant 0 : index
    %c7 = arith.constant 7 : index
    %7 = memref.load %arg4[%c0_7, %c7] : memref<4x8xf32, #tpu.memory_space<smem>>
    %c1_8 = arith.constant 1 : index
    %c0_9 = arith.constant 0 : index
    %8 = memref.load %arg4[%c1_8, %c0_9] : memref<4x8xf32, #tpu.memory_space<smem>>
    %c1_10 = arith.constant 1 : index
    %c1_11 = arith.constant 1 : index
    %9 = memref.load %arg4[%c1_10, %c1_11] : memref<4x8xf32, #tpu.memory_space<smem>>
    %c1_12 = arith.constant 1 : index
    %c2_13 = arith.constant 2 : index
    %10 = memref.load %arg4[%c1_12, %c2_13] : memref<4x8xf32, #tpu.memory_space<smem>>
    %c1_14 = arith.constant 1 : index
    %c3_15 = arith.constant 3 : index
    %11 = memref.load %arg4[%c1_14, %c3_15] : memref<4x8xf32, #tpu.memory_space<smem>>
    %c1_16 = arith.constant 1 : index
    %c4_17 = arith.constant 4 : index
    %12 = memref.load %arg4[%c1_16, %c4_17] : memref<4x8xf32, #tpu.memory_space<smem>>
    %c1_18 = arith.constant 1 : index
    %c5_19 = arith.constant 5 : index
    %13 = memref.load %arg4[%c1_18, %c5_19] : memref<4x8xf32, #tpu.memory_space<smem>>
    %c1_20 = arith.constant 1 : index
    %c6_21 = arith.constant 6 : index
    %14 = memref.load %arg4[%c1_20, %c6_21] : memref<4x8xf32, #tpu.memory_space<smem>>
    %c1_22 = arith.constant 1 : index
    %c7_23 = arith.constant 7 : index
    %15 = memref.load %arg4[%c1_22, %c7_23] : memref<4x8xf32, #tpu.memory_space<smem>>
    %c2_24 = arith.constant 2 : index
    %c0_25 = arith.constant 0 : index
    %16 = memref.load %arg4[%c2_24, %c0_25] : memref<4x8xf32, #tpu.memory_space<smem>>
    %c2_26 = arith.constant 2 : index
    %c1_27 = arith.constant 1 : index
    %17 = memref.load %arg4[%c2_26, %c1_27] : memref<4x8xf32, #tpu.memory_space<smem>>
    %c2_28 = arith.constant 2 : index
    %c2_29 = arith.constant 2 : index
    %18 = memref.load %arg4[%c2_28, %c2_29] : memref<4x8xf32, #tpu.memory_space<smem>>
    %c2_30 = arith.constant 2 : index
    %c3_31 = arith.constant 3 : index
    %19 = memref.load %arg4[%c2_30, %c3_31] : memref<4x8xf32, #tpu.memory_space<smem>>
    %c2_32 = arith.constant 2 : index
    %c4_33 = arith.constant 4 : index
    %20 = memref.load %arg4[%c2_32, %c4_33] : memref<4x8xf32, #tpu.memory_space<smem>>
    %c2_34 = arith.constant 2 : index
    %c5_35 = arith.constant 5 : index
    %21 = memref.load %arg4[%c2_34, %c5_35] : memref<4x8xf32, #tpu.memory_space<smem>>
    %c2_36 = arith.constant 2 : index
    %c6_37 = arith.constant 6 : index
    %22 = memref.load %arg4[%c2_36, %c6_37] : memref<4x8xf32, #tpu.memory_space<smem>>
    %c2_38 = arith.constant 2 : index
    %c7_39 = arith.constant 7 : index
    %23 = memref.load %arg4[%c2_38, %c7_39] : memref<4x8xf32, #tpu.memory_space<smem>>
    %c3_40 = arith.constant 3 : index
    %c0_41 = arith.constant 0 : index
    %24 = memref.load %arg4[%c3_40, %c0_41] : memref<4x8xf32, #tpu.memory_space<smem>>
    %c3_42 = arith.constant 3 : index
    %c1_43 = arith.constant 1 : index
    %25 = memref.load %arg4[%c3_42, %c1_43] : memref<4x8xf32, #tpu.memory_space<smem>>
    %c3_44 = arith.constant 3 : index
    %c2_45 = arith.constant 2 : index
    %26 = memref.load %arg4[%c3_44, %c2_45] : memref<4x8xf32, #tpu.memory_space<smem>>
    %c3_46 = arith.constant 3 : index
    %c3_47 = arith.constant 3 : index
    %27 = memref.load %arg4[%c3_46, %c3_47] : memref<4x8xf32, #tpu.memory_space<smem>>
    %c3_48 = arith.constant 3 : index
    %c4_49 = arith.constant 4 : index
    %28 = memref.load %arg4[%c3_48, %c4_49] : memref<4x8xf32, #tpu.memory_space<smem>>
    %c3_50 = arith.constant 3 : index
    %c5_51 = arith.constant 5 : index
    %29 = memref.load %arg4[%c3_50, %c5_51] : memref<4x8xf32, #tpu.memory_space<smem>>
    %c3_52 = arith.constant 3 : index
    %c6_53 = arith.constant 6 : index
    %30 = memref.load %arg4[%c3_52, %c6_53] : memref<4x8xf32, #tpu.memory_space<smem>>
    %c3_54 = arith.constant 3 : index
    %c7_55 = arith.constant 7 : index
    %31 = memref.load %arg4[%c3_54, %c7_55] : memref<4x8xf32, #tpu.memory_space<smem>>
    %c0_56 = arith.constant 0 : index
    %32 = memref.load %arg5[%c0_56] : memref<8xf32, #tpu.memory_space<smem>>
    %c1_57 = arith.constant 1 : index
    %33 = memref.load %arg5[%c1_57] : memref<8xf32, #tpu.memory_space<smem>>
    %c2_58 = arith.constant 2 : index
    %34 = memref.load %arg5[%c2_58] : memref<8xf32, #tpu.memory_space<smem>>
    %c3_59 = arith.constant 3 : index
    %35 = memref.load %arg5[%c3_59] : memref<8xf32, #tpu.memory_space<smem>>
    %c4_60 = arith.constant 4 : index
    %36 = memref.load %arg5[%c4_60] : memref<8xf32, #tpu.memory_space<smem>>
    %c5_61 = arith.constant 5 : index
    %37 = memref.load %arg5[%c5_61] : memref<8xf32, #tpu.memory_space<smem>>
    %c6_62 = arith.constant 6 : index
    %38 = memref.load %arg5[%c6_62] : memref<8xf32, #tpu.memory_space<smem>>
    %c7_63 = arith.constant 7 : index
    %39 = memref.load %arg5[%c7_63] : memref<8xf32, #tpu.memory_space<smem>>
    %c0_64 = arith.constant 0 : index
    %c0_65 = arith.constant 0 : index
    %c0_66 = arith.constant 0 : index
    %c0_67 = arith.constant 0 : index
    %40 = vector.load %arg2[%c0_64, %c0_65, %c0_66, %c0_67] : memref<1x3x2x128xf32, #tpu.memory_space<vmem>>, vector<1x1x2x128xf32>
    %41 = vector.shape_cast %40 : vector<1x1x2x128xf32> to vector<2x128xf32>
    %c0_68 = arith.constant 0 : index
    %c1_69 = arith.constant 1 : index
    %c0_70 = arith.constant 0 : index
    %c0_71 = arith.constant 0 : index
    %42 = vector.load %arg2[%c0_68, %c1_69, %c0_70, %c0_71] : memref<1x3x2x128xf32, #tpu.memory_space<vmem>>, vector<1x1x2x128xf32>
    %43 = vector.shape_cast %42 : vector<1x1x2x128xf32> to vector<2x128xf32>
    %c0_72 = arith.constant 0 : index
    %c2_73 = arith.constant 2 : index
    %c0_74 = arith.constant 0 : index
    %c0_75 = arith.constant 0 : index
    %44 = vector.load %arg2[%c0_72, %c2_73, %c0_74, %c0_75] : memref<1x3x2x128xf32, #tpu.memory_space<vmem>>, vector<1x1x2x128xf32>
    %45 = vector.shape_cast %44 : vector<1x1x2x128xf32> to vector<2x128xf32>
    %c0_76 = arith.constant 0 : index
    %c0_77 = arith.constant 0 : index
    %c0_78 = arith.constant 0 : index
    %c0_79 = arith.constant 0 : index
    %46 = vector.load %arg3[%c0_76, %c0_77, %c0_78, %c0_79] : memref<1x1x2x128xf32, #tpu.memory_space<vmem>>, vector<1x1x2x128xf32>
    %47 = vector.shape_cast %46 : vector<1x1x2x128xf32> to vector<2x128xf32>
    %48 = vector.broadcast %0 : f32 to vector<2x128xf32>
    %49 = arith.mulf %41, %48 : vector<2x128xf32>
    %50 = vector.broadcast %32 : f32 to vector<2x128xf32>
    %51 = arith.addf %49, %50 : vector<2x128xf32>
    %52 = vector.broadcast %8 : f32 to vector<2x128xf32>
    %53 = arith.mulf %43, %52 : vector<2x128xf32>
    %54 = arith.addf %51, %53 : vector<2x128xf32>
    %55 = vector.broadcast %16 : f32 to vector<2x128xf32>
    %56 = arith.mulf %45, %55 : vector<2x128xf32>
    %57 = arith.addf %54, %56 : vector<2x128xf32>
    %58 = vector.broadcast %24 : f32 to vector<2x128xf32>
    %59 = arith.mulf %47, %58 : vector<2x128xf32>
    %60 = arith.addf %57, %59 : vector<2x128xf32>
    %61 = vector.broadcast %1 : f32 to vector<2x128xf32>
    %62 = arith.mulf %41, %61 : vector<2x128xf32>
    %63 = vector.broadcast %33 : f32 to vector<2x128xf32>
    %64 = arith.addf %62, %63 : vector<2x128xf32>
    %65 = vector.broadcast %9 : f32 to vector<2x128xf32>
    %66 = arith.mulf %43, %65 : vector<2x128xf32>
    %67 = arith.addf %64, %66 : vector<2x128xf32>
    %68 = vector.broadcast %17 : f32 to vector<2x128xf32>
    %69 = arith.mulf %45, %68 : vector<2x128xf32>
    %70 = arith.addf %67, %69 : vector<2x128xf32>
    %71 = vector.broadcast %25 : f32 to vector<2x128xf32>
    %72 = arith.mulf %47, %71 : vector<2x128xf32>
    %73 = arith.addf %70, %72 : vector<2x128xf32>
    %74 = vector.broadcast %2 : f32 to vector<2x128xf32>
    %75 = arith.mulf %41, %74 : vector<2x128xf32>
    %76 = vector.broadcast %34 : f32 to vector<2x128xf32>
    %77 = arith.addf %75, %76 : vector<2x128xf32>
    %78 = vector.broadcast %10 : f32 to vector<2x128xf32>
    %79 = arith.mulf %43, %78 : vector<2x128xf32>
    %80 = arith.addf %77, %79 : vector<2x128xf32>
    %81 = vector.broadcast %18 : f32 to vector<2x128xf32>
    %82 = arith.mulf %45, %81 : vector<2x128xf32>
    %83 = arith.addf %80, %82 : vector<2x128xf32>
    %84 = vector.broadcast %26 : f32 to vector<2x128xf32>
    %85 = arith.mulf %47, %84 : vector<2x128xf32>
    %86 = arith.addf %83, %85 : vector<2x128xf32>
    %87 = vector.broadcast %3 : f32 to vector<2x128xf32>
    %88 = arith.mulf %41, %87 : vector<2x128xf32>
    %89 = vector.broadcast %35 : f32 to vector<2x128xf32>
    %90 = arith.addf %88, %89 : vector<2x128xf32>
    %91 = vector.broadcast %11 : f32 to vector<2x128xf32>
    %92 = arith.mulf %43, %91 : vector<2x128xf32>
    %93 = arith.addf %90, %92 : vector<2x128xf32>
    %94 = vector.broadcast %19 : f32 to vector<2x128xf32>
    %95 = arith.mulf %45, %94 : vector<2x128xf32>
    %96 = arith.addf %93, %95 : vector<2x128xf32>
    %97 = vector.broadcast %27 : f32 to vector<2x128xf32>
    %98 = arith.mulf %47, %97 : vector<2x128xf32>
    %99 = arith.addf %96, %98 : vector<2x128xf32>
    %100 = vector.broadcast %4 : f32 to vector<2x128xf32>
    %101 = arith.mulf %41, %100 : vector<2x128xf32>
    %102 = vector.broadcast %36 : f32 to vector<2x128xf32>
    %103 = arith.addf %101, %102 : vector<2x128xf32>
    %104 = vector.broadcast %12 : f32 to vector<2x128xf32>
    %105 = arith.mulf %43, %104 : vector<2x128xf32>
    %106 = arith.addf %103, %105 : vector<2x128xf32>
    %107 = vector.broadcast %20 : f32 to vector<2x128xf32>
    %108 = arith.mulf %45, %107 : vector<2x128xf32>
    %109 = arith.addf %106, %108 : vector<2x128xf32>
    %110 = vector.broadcast %28 : f32 to vector<2x128xf32>
    %111 = arith.mulf %47, %110 : vector<2x128xf32>
    %112 = arith.addf %109, %111 : vector<2x128xf32>
    %113 = vector.broadcast %5 : f32 to vector<2x128xf32>
    %114 = arith.mulf %41, %113 : vector<2x128xf32>
    %115 = vector.broadcast %37 : f32 to vector<2x128xf32>
    %116 = arith.addf %114, %115 : vector<2x128xf32>
    %117 = vector.broadcast %13 : f32 to vector<2x128xf32>
    %118 = arith.mulf %43, %117 : vector<2x128xf32>
    %119 = arith.addf %116, %118 : vector<2x128xf32>
    %120 = vector.broadcast %21 : f32 to vector<2x128xf32>
    %121 = arith.mulf %45, %120 : vector<2x128xf32>
    %122 = arith.addf %119, %121 : vector<2x128xf32>
    %123 = vector.broadcast %29 : f32 to vector<2x128xf32>
    %124 = arith.mulf %47, %123 : vector<2x128xf32>
    %125 = arith.addf %122, %124 : vector<2x128xf32>
    %126 = vector.broadcast %6 : f32 to vector<2x128xf32>
    %127 = arith.mulf %41, %126 : vector<2x128xf32>
    %128 = vector.broadcast %38 : f32 to vector<2x128xf32>
    %129 = arith.addf %127, %128 : vector<2x128xf32>
    %130 = vector.broadcast %14 : f32 to vector<2x128xf32>
    %131 = arith.mulf %43, %130 : vector<2x128xf32>
    %132 = arith.addf %129, %131 : vector<2x128xf32>
    %133 = vector.broadcast %22 : f32 to vector<2x128xf32>
    %134 = arith.mulf %45, %133 : vector<2x128xf32>
    %135 = arith.addf %132, %134 : vector<2x128xf32>
    %136 = vector.broadcast %30 : f32 to vector<2x128xf32>
    %137 = arith.mulf %47, %136 : vector<2x128xf32>
    %138 = arith.addf %135, %137 : vector<2x128xf32>
    %139 = vector.broadcast %7 : f32 to vector<2x128xf32>
    %140 = arith.mulf %41, %139 : vector<2x128xf32>
    %141 = vector.broadcast %39 : f32 to vector<2x128xf32>
    %142 = arith.addf %140, %141 : vector<2x128xf32>
    %143 = vector.broadcast %15 : f32 to vector<2x128xf32>
    %144 = arith.mulf %43, %143 : vector<2x128xf32>
    %145 = arith.addf %142, %144 : vector<2x128xf32>
    %146 = vector.broadcast %23 : f32 to vector<2x128xf32>
    %147 = arith.mulf %45, %146 : vector<2x128xf32>
    %148 = arith.addf %145, %147 : vector<2x128xf32>
    %149 = vector.broadcast %31 : f32 to vector<2x128xf32>
    %150 = arith.mulf %47, %149 : vector<2x128xf32>
    %151 = arith.addf %148, %150 : vector<2x128xf32>
    %152 = arith.mulf %60, %60 : vector<2x128xf32>
    %153 = arith.mulf %73, %73 : vector<2x128xf32>
    %154 = arith.addf %152, %153 : vector<2x128xf32>
    %155 = arith.mulf %86, %86 : vector<2x128xf32>
    %156 = arith.addf %154, %155 : vector<2x128xf32>
    %157 = arith.mulf %99, %99 : vector<2x128xf32>
    %158 = arith.addf %156, %157 : vector<2x128xf32>
    %159 = arith.mulf %112, %112 : vector<2x128xf32>
    %160 = arith.addf %158, %159 : vector<2x128xf32>
    %161 = arith.mulf %125, %125 : vector<2x128xf32>
    %162 = arith.addf %160, %161 : vector<2x128xf32>
    %163 = arith.mulf %138, %138 : vector<2x128xf32>
    %164 = arith.addf %162, %163 : vector<2x128xf32>
    %165 = arith.mulf %151, %151 : vector<2x128xf32>
    %166 = arith.addf %164, %165 : vector<2x128xf32>
    %cst = arith.constant 9.99999996E-13 : f32
    %167 = vector.broadcast %cst : f32 to vector<2x128xf32>
    %168 = arith.addf %166, %167 : vector<2x128xf32>
    %169 = math.rsqrt %168 : vector<2x128xf32>
    %170 = arith.mulf %60, %169 : vector<2x128xf32>
    %171 = arith.mulf %73, %169 : vector<2x128xf32>
    %172 = arith.mulf %86, %169 : vector<2x128xf32>
    %173 = arith.mulf %99, %169 : vector<2x128xf32>
    %174 = arith.mulf %112, %169 : vector<2x128xf32>
    %175 = arith.mulf %125, %169 : vector<2x128xf32>
    %176 = arith.mulf %138, %169 : vector<2x128xf32>
    %177 = arith.mulf %151, %169 : vector<2x128xf32>
    %c0_80 = arith.constant 0 : index
    %c0_81 = arith.constant 0 : index
    %c0_82 = arith.constant 0 : index
    %c0_83 = arith.constant 0 : index
    %178 = vector.load %arg6[%c0_80, %c0_81, %c0_82, %c0_83] : memref<1x8x2x128xf32, #tpu.memory_space<vmem>>, vector<1x1x2x128xf32>
    %179 = vector.shape_cast %178 : vector<1x1x2x128xf32> to vector<2x128xf32>
    %180 = vector.shape_cast %170 : vector<2x128xf32> to vector<1x1x2x128xf32>
    tpu.vector_store %arg6[%c0_80, %c0_81, %c0_82, %c0_83], %180 {strides = array<i32>} : memref<1x8x2x128xf32, #tpu.memory_space<vmem>>, vector<1x1x2x128xf32>,
    %c0_84 = arith.constant 0 : index
    %c1_85 = arith.constant 1 : index
    %c0_86 = arith.constant 0 : index
    %c0_87 = arith.constant 0 : index
    %181 = vector.load %arg6[%c0_84, %c1_85, %c0_86, %c0_87] : memref<1x8x2x128xf32, #tpu.memory_space<vmem>>, vector<1x1x2x128xf32>
    %182 = vector.shape_cast %181 : vector<1x1x2x128xf32> to vector<2x128xf32>
    %183 = vector.shape_cast %171 : vector<2x128xf32> to vector<1x1x2x128xf32>
    tpu.vector_store %arg6[%c0_84, %c1_85, %c0_86, %c0_87], %183 {strides = array<i32>} : memref<1x8x2x128xf32, #tpu.memory_space<vmem>>, vector<1x1x2x128xf32>,
    %c0_88 = arith.constant 0 : index
    %c2_89 = arith.constant 2 : index
    %c0_90 = arith.constant 0 : index
    %c0_91 = arith.constant 0 : index
    %184 = vector.load %arg6[%c0_88, %c2_89, %c0_90, %c0_91] : memref<1x8x2x128xf32, #tpu.memory_space<vmem>>, vector<1x1x2x128xf32>
    %185 = vector.shape_cast %184 : vector<1x1x2x128xf32> to vector<2x128xf32>
    %186 = vector.shape_cast %172 : vector<2x128xf32> to vector<1x1x2x128xf32>
    tpu.vector_store %arg6[%c0_88, %c2_89, %c0_90, %c0_91], %186 {strides = array<i32>} : memref<1x8x2x128xf32, #tpu.memory_space<vmem>>, vector<1x1x2x128xf32>,
    %c0_92 = arith.constant 0 : index
    %c3_93 = arith.constant 3 : index
    %c0_94 = arith.constant 0 : index
    %c0_95 = arith.constant 0 : index
    %187 = vector.load %arg6[%c0_92, %c3_93, %c0_94, %c0_95] : memref<1x8x2x128xf32, #tpu.memory_space<vmem>>, vector<1x1x2x128xf32>
    %188 = vector.shape_cast %187 : vector<1x1x2x128xf32> to vector<2x128xf32>
    %189 = vector.shape_cast %173 : vector<2x128xf32> to vector<1x1x2x128xf32>
    tpu.vector_store %arg6[%c0_92, %c3_93, %c0_94, %c0_95], %189 {strides = array<i32>} : memref<1x8x2x128xf32, #tpu.memory_space<vmem>>, vector<1x1x2x128xf32>,
    %c0_96 = arith.constant 0 : index
    %c4_97 = arith.constant 4 : index
    %c0_98 = arith.constant 0 : index
    %c0_99 = arith.constant 0 : index
    %190 = vector.load %arg6[%c0_96, %c4_97, %c0_98, %c0_99] : memref<1x8x2x128xf32, #tpu.memory_space<vmem>>, vector<1x1x2x128xf32>
    %191 = vector.shape_cast %190 : vector<1x1x2x128xf32> to vector<2x128xf32>
    %192 = vector.shape_cast %174 : vector<2x128xf32> to vector<1x1x2x128xf32>
    tpu.vector_store %arg6[%c0_96, %c4_97, %c0_98, %c0_99], %192 {strides = array<i32>} : memref<1x8x2x128xf32, #tpu.memory_space<vmem>>, vector<1x1x2x128xf32>,
    %c0_100 = arith.constant 0 : index
    %c5_101 = arith.constant 5 : index
    %c0_102 = arith.constant 0 : index
    %c0_103 = arith.constant 0 : index
    %193 = vector.load %arg6[%c0_100, %c5_101, %c0_102, %c0_103] : memref<1x8x2x128xf32, #tpu.memory_space<vmem>>, vector<1x1x2x128xf32>
    %194 = vector.shape_cast %193 : vector<1x1x2x128xf32> to vector<2x128xf32>
    %195 = vector.shape_cast %175 : vector<2x128xf32> to vector<1x1x2x128xf32>
    tpu.vector_store %arg6[%c0_100, %c5_101, %c0_102, %c0_103], %195 {strides = array<i32>} : memref<1x8x2x128xf32, #tpu.memory_space<vmem>>, vector<1x1x2x128xf32>,
    %c0_104 = arith.constant 0 : index
    %c6_105 = arith.constant 6 : index
    %c0_106 = arith.constant 0 : index
    %c0_107 = arith.constant 0 : index
    %196 = vector.load %arg6[%c0_104, %c6_105, %c0_106, %c0_107] : memref<1x8x2x128xf32, #tpu.memory_space<vmem>>, vector<1x1x2x128xf32>
    %197 = vector.shape_cast %196 : vector<1x1x2x128xf32> to vector<2x128xf32>
    %198 = vector.shape_cast %176 : vector<2x128xf32> to vector<1x1x2x128xf32>
    tpu.vector_store %arg6[%c0_104, %c6_105, %c0_106, %c0_107], %198 {strides = array<i32>} : memref<1x8x2x128xf32, #tpu.memory_space<vmem>>, vector<1x1x2x128xf32>,
    %c0_108 = arith.constant 0 : index
    %c7_109 = arith.constant 7 : index
    %c0_110 = arith.constant 0 : index
    %c0_111 = arith.constant 0 : index
    %199 = vector.load %arg6[%c0_108, %c7_109, %c0_110, %c0_111] : memref<1x8x2x128xf32, #tpu.memory_space<vmem>>, vector<1x1x2x128xf32>
    %200 = vector.shape_cast %199 : vector<1x1x2x128xf32> to vector<2x128xf32>
    %201 = vector.shape_cast %177 : vector<2x128xf32> to vector<1x1x2x128xf32>
    tpu.vector_store %arg6[%c0_108, %c7_109, %c0_110, %c0_111], %201 {strides = array<i32>} : memref<1x8x2x128xf32, #tpu.memory_space<vmem>>, vector<1x1x2x128xf32>,
    return
  }
  func.func @transform_0(%arg0: i32, %arg1: i32) -> (i32, i32, i32, i32) {
    %c0_i32 = arith.constant 0 : i32
    %c0_i32_0 = arith.constant 0 : i32
    %c0_i32_1 = arith.constant 0 : i32
    return %arg0, %c0_i32, %arg1, %c0_i32_0 : i32, i32, i32, i32
  }
  func.func @transform_1(%arg0: i32, %arg1: i32) -> (i32, i32, i32, i32) {
    %c0_i32 = arith.constant 0 : i32
    %c0_i32_0 = arith.constant 0 : i32
    %c0_i32_1 = arith.constant 0 : i32
    return %arg0, %c0_i32, %arg1, %c0_i32_0 : i32, i32, i32, i32
  }
  func.func @transform_2(%arg0: i32, %arg1: i32) -> (i32, i32) {
    %c0_i32 = arith.constant 0 : i32
    %c0_i32_0 = arith.constant 0 : i32
    %c0_i32_1 = arith.constant 0 : i32
    return %c0_i32, %c0_i32_0 : i32, i32
  }
  func.func @transform_3(%arg0: i32, %arg1: i32) -> i32 {
    %c0_i32 = arith.constant 0 : i32
    %c0_i32_0 = arith.constant 0 : i32
    return %c0_i32 : i32
  }
  func.func @transform_4(%arg0: i32, %arg1: i32) -> (i32, i32, i32, i32) {
    %c0_i32 = arith.constant 0 : i32
    %c0_i32_0 = arith.constant 0 : i32
    %c0_i32_1 = arith.constant 0 : i32
    return %arg0, %c0_i32, %arg1, %c0_i32_0 : i32, i32, i32, i32
  }
}

</mosaic_0001>

<llo_original>
// kernel: tpu_custom_call.1
$region0: #{tpu_custom_call.1}
  #allocation0 [shape = 'u32[]', space=smem, size = 0x4, offset = 0x4, fixed_abs, tag = 'smem constant byte address 0x4 - core index']
  #allocation1 [shape = 'u32[144,128]{1,0:T(1,128)}', space=vmem, size = 0x12000, scoped, tag = 'internal scratch']
  %s0 = inlined_call_operand.hbm [shape: f32[2,3,2,128], index: 0, kind: input, shape index: {}]
  %s1 = inlined_call_operand.hbm [shape: f32[2,1,2,128], index: 1, kind: input, shape index: {}]
  %s2 = inlined_call_operand.vmem [shape: f32[4,8], index: 2, kind: input, shape index: {}]
  %s3 = inlined_call_operand.vmem [shape: f32[8], index: 3, kind: input, shape index: {}]
  %s4 = inlined_call_operand.hbm [shape: f32[2,8,2,128], index: 4, kind: output, shape index: {}]
  %s5 = sld [smem:[#allocation0]]
  $region65: #{tpu_custom_call.1} parent=0
    _
  %s7 = ssub.s32 1, %s5
  %s8 = scalar_select 0, %s7, %s5
  $region1: #{tpu_custom_call.1} parent=0
    #allocation2 [shape = 'u8[6144]{0}', space=vmem, size = 0x1800, scoped, tag = 'input window, operand 0']
    #allocation3 [shape = 's32[2]{0}', space=sflag, size = 0x8, scoped, tag = 'scoped memory for tpu_custom_call.1']
    #allocation4 [shape = 's32[2]{0}', space=sflag, size = 0x8, scoped, tag = 'scoped memory for tpu_custom_call.1']
    #allocation5 [shape = 's32[2]{0}', space=sflag, size = 0x8, scoped, tag = 'scoped memory for tpu_custom_call.1']
    #allocation6 [shape = 'u8[2048]{0}', space=vmem, size = 0x800, scoped, tag = 'input window, operand 1']
    #allocation7 [shape = 's32[2]{0}', space=sflag, size = 0x8, scoped, tag = 'scoped memory for tpu_custom_call.1']
    #allocation8 [shape = 'u8[2048]{0}', space=smem, size = 0x800, scoped, tag = 'input window, operand 2, single buffered']
    #allocation9 [shape = 'u8[512]{0}', space=smem, size = 0x200, scoped, tag = 'input window, operand 3, single buffered']
    #allocation10 [shape = 's32[1]{0}', space=sflag, size = 0x4, scoped, tag = 'scoped memory for tpu_custom_call.1']
    #allocation11 [shape = 'u8[16384]{0}', space=vmem, size = 0x4000, scoped, tag = 'output window, operand 0']
    %9 = vsyncpa [#allocation3], 0
    %s10 = scalar_lea.sflag [#allocation3], 1
    %11 = vsyncpa %s10, 0
    %12 = vsyncpa [#allocation7], 0
    %s13 = scalar_lea.sflag [#allocation7], 1
    %14 = vsyncpa %s13, 0
    %15 = vsyncpa [#allocation5], 0
    %16 = vsyncpa [#allocation10], 0
    %17 = vsyncpa [#allocation4], 0
    %s18 = scalar_lea.sflag [#allocation4], 1
    %19 = vsyncpa %s18, 0
    loop: start=0, step=1, limit=4
    $region2: #{tpu_custom_call.1} parent=1 // loop_pre_header
      _
    $region3: #{tpu_custom_call.1} parent=1 // loop_header
      %s21 = sphi 0, %s25
      %p22 = scmp.ge.s32.totalorder %s21, 4
      %s28 = sphi 0, %s40
      %s29 = sphi 0, %s36
      %s30 = sphi 0, %s28
      %s31 = sphi 0, %s29
      %s32 = sphi 0, %s30
      %s33 = sphi 0, %s31
      %s45 = sphi 0, %s47
      %s48 = sphi 0, %s45
      %s49 = sphi 0, %s48
      %s65 = sphi 0, %s49
      %s73 = sphi 0, %s75
      %s76 = sphi 0, %s73
      %s77 = sphi 0, %s76
      %s93 = sphi 0, %s77
      %s97 = sphi 0, %s97
      %s99 = sphi 0, %s97
      %s100 = sphi 0, %s99
      %s114 = sphi 0, %s100
      %s118 = sphi 0, %s118
      %s120 = sphi 0, %s118
      %s121 = sphi 0, %s120
      %s135 = sphi 0, %s121
      %s143 = sphi 0, %s145
      %s146 = sphi 0, %s143
      %s147 = sphi 0, %s146
      %s163 = sphi 0, %s147
    $region4: #{tpu_custom_call.1} parent=1 // loop_header_branch
      %24 = sbr.rel (%p22) target = $region8
    $region5: #{tpu_custom_call.1} parent=1 // loop_body
      %s26 = ssub.s32 %s21, 1
      %s27 = ssub.s32 %s21, 2
      %s34 = sadd.s32 1, %s29
      %p35 = scmp.ge.s32.totalorder %s34, 1
      %s36 = scalar_select %p35, 0, %s34
      %s37 = sadd.s32 1, %s28
      %s38 = scalar_select %p35, %s37, %s28
      %p39 = scmp.ge.s32.totalorder %s38, 2
      %s40 = scalar_select %p39, 0, %s38
      %s41 = ssub.s32 %s28, %s40
      %s42 = ssub.s32 %s29, %s36
      %s43 = sor.u32 %s41, %s42
      %p44 = scmp.eq.s32.totalorder %s43, 0
      %s46 = sadd.s32 %s45, 1
      %s47 = scalar_select %p44, %s45, %s46
      %p50 = pneg %p44
      %p51 = scmp.eq.s32.totalorder %s21, 1
      %p52 = por %p50, %p51
      %p53 = scmp.ne.s32.totalorder %s45, %s48
      %p54 = scmp.eq.s32.totalorder %s21, 0
      %p55 = por %p53, %p54
      %p56 = scmp.ne.s32.totalorder %s45, %s48
      %p57 = scmp.eq.s32.totalorder %s26, 1
      %p58 = por %p56, %p57
      %p59 = scmp.ne.s32.totalorder %s48, %s49
      %p60 = scmp.eq.s32.totalorder %s26, 0
      %p61 = por %p59, %p60
      %p62 = scmp.ne.s32.totalorder %s48, %s49
      %p63 = scmp.eq.s32.totalorder %s27, 1
      %p64 = por %p62, %p63
      %p66 = scmp.ne.s32.totalorder %s49, %s65
      %p67 = scmp.eq.s32.totalorder %s27, 0
      %p68 = por %p66, %p67
      %s69 = ssub.s32 %s28, %s40
      %s70 = ssub.s32 %s29, %s36
      %s71 = sor.u32 %s69, %s70
      %p72 = scmp.eq.s32.totalorder %s71, 0
      %s74 = sadd.s32 %s73, 1
      %s75 = scalar_select %p72, %s73, %s74
      %p78 = pneg %p72
      %p79 = scmp.eq.s32.totalorder %s21, 1
      %p80 = por %p78, %p79
      %p81 = scmp.ne.s32.totalorder %s73, %s76
      %p82 = scmp.eq.s32.totalorder %s21, 0
      %p83 = por %p81, %p82
      %p84 = scmp.ne.s32.totalorder %s73, %s76
      %p85 = scmp.eq.s32.totalorder %s26, 1
      %p86 = por %p84, %p85
      %p87 = scmp.ne.s32.totalorder %s76, %s77
      %p88 = scmp.eq.s32.totalorder %s26, 0
      %p89 = por %p87, %p88
      %p90 = scmp.ne.s32.totalorder %s76, %s77
      %p91 = scmp.eq.s32.totalorder %s27, 1
      %p92 = por %p90, %p91
      %p94 = scmp.ne.s32.totalorder %s77, %s93
      %p95 = scmp.eq.s32.totalorder %s27, 0
      %p96 = por %p94, %p95
      %s98 = sadd.s32 %s97, 1
      %p101 = scmp.eq.s32.totalorder %s21, 1
      %p102 = scmp.ne.s32.totalorder %s97, %s99
      %p103 = scmp.eq.s32.totalorder %s21, 0
      %p104 = por %p102, %p103
      %p105 = scmp.ne.s32.totalorder %s97, %s99
      %p106 = scmp.eq.s32.totalorder %s26, 1
      %p107 = por %p105, %p106
      %p108 = scmp.ne.s32.totalorder %s99, %s100
      %p109 = scmp.eq.s32.totalorder %s26, 0
      %p110 = por %p108, %p109
      %p111 = scmp.ne.s32.totalorder %s99, %s100
      %p112 = scmp.eq.s32.totalorder %s27, 1
      %p113 = por %p111, %p112
      %p115 = scmp.ne.s32.totalorder %s100, %s114
      %p116 = scmp.eq.s32.totalorder %s27, 0
      %p117 = por %p115, %p116
      %s119 = sadd.s32 %s118, 1
      %p122 = scmp.eq.s32.totalorder %s21, 1
      %p123 = scmp.ne.s32.totalorder %s118, %s120
      %p124 = scmp.eq.s32.totalorder %s21, 0
      %p125 = por %p123, %p124
      %p126 = scmp.ne.s32.totalorder %s118, %s120
      %p127 = scmp.eq.s32.totalorder %s26, 1
      %p128 = por %p126, %p127
      %p129 = scmp.ne.s32.totalorder %s120, %s121
      %p130 = scmp.eq.s32.totalorder %s26, 0
      %p131 = por %p129, %p130
      %p132 = scmp.ne.s32.totalorder %s120, %s121
      %p133 = scmp.eq.s32.totalorder %s27, 1
      %p134 = por %p132, %p133
      %p136 = scmp.ne.s32.totalorder %s121, %s135
      %p137 = scmp.eq.s32.totalorder %s27, 0
      %p138 = por %p136, %p137
      %s139 = ssub.s32 %s28, %s40
      %s140 = ssub.s32 %s29, %s36
      %s141 = sor.u32 %s139, %s140
      %p142 = scmp.eq.s32.totalorder %s141, 0
      %s144 = sadd.s32 %s143, 1
      %s145 = scalar_select %p142, %s143, %s144
      %p148 = pneg %p142
      %p149 = scmp.eq.s32.totalorder %s21, 1
      %p150 = por %p148, %p149
      %p151 = scmp.ne.s32.totalorder %s143, %s146
      %p152 = scmp.eq.s32.totalorder %s21, 0
      %p153 = por %p151, %p152
      %p154 = scmp.ne.s32.totalorder %s143, %s146
      %p155 = scmp.eq.s32.totalorder %s26, 1
      %p156 = por %p154, %p155
      %p157 = scmp.ne.s32.totalorder %s146, %s147
      %p158 = scmp.eq.s32.totalorder %s26, 0
      %p159 = por %p157, %p158
      %p160 = scmp.ne.s32.totalorder %s146, %s147
      %p161 = scmp.eq.s32.totalorder %s27, 1
      %p162 = por %p160, %p161
      %p164 = scmp.ne.s32.totalorder %s147, %s163
      %p165 = scmp.eq.s32.totalorder %s27, 0
      %p166 = por %p164, %p165
      %p167 = scmp.le.s32.totalorder 1, %s21
      %p168 = scmp.lt.s32.totalorder %s21, 3
      %p169 = pnand %p167, %p168
      %p170 = pneg %p169
      // Predicated region
      $region9: #{tpu_custom_call.1} parent=5 // pred_check
        _
      $region10: #{tpu_custom_call.1} parent=5 // pred_check_branch
        %172 = sbr.rel (%p169) target = $region12
      $region11: #{tpu_custom_call.1} parent=5 // pred_region
        %s173 = ssub.s32 %s21, 1
        // Predicated region
        $region13: #{tpu_custom_call.1} parent=11 // pred_check
          %p174 = pneg %p110
        $region14: #{tpu_custom_call.1} parent=11 // pred_check_branch
          %176 = sbr.rel (%p174) target = $region16
        $region15: #{tpu_custom_call.1} parent=11 // pred_region
          %s178 = ssub.s32 64, 64
          %179 = vsyncadd [#allocation5], %s178
          %s181 = sshll.u32 %s2, 4
          %s182 = int_to_ptr.vmem [resolvable:$true] %s181
          %184 = dma.vmem_to_smem %s182, 64, [#allocation8], [#allocation5]
        $region16: #{tpu_custom_call.1} parent=11 // pred_fallthru
          _
        // Predicated region
        $region17: #{tpu_custom_call.1} parent=11 // pred_check
          %p185 = pneg %p131
        $region18: #{tpu_custom_call.1} parent=11 // pred_check_branch
          %187 = sbr.rel (%p185) target = $region20
        $region19: #{tpu_custom_call.1} parent=11 // pred_region
          %s189 = ssub.s32 16, 16
          %190 = vsyncadd [#allocation10], %s189
          %s192 = sshll.u32 %s3, 4
          %s193 = int_to_ptr.vmem [resolvable:$true] %s192
          %195 = dma.vmem_to_smem %s193, 16, [#allocation9], [#allocation10]
        $region20: #{tpu_custom_call.1} parent=11 // pred_fallthru
          _
      $region12: #{tpu_custom_call.1} parent=5 // pred_fallthru
        _
      %p196 = scmp.lt.s32.totalorder %s21, 2
      // Predicated region
      $region21: #{tpu_custom_call.1} parent=5 // pred_check
        %p197 = pneg %p196
      $region22: #{tpu_custom_call.1} parent=5 // pred_check_branch
        %199 = sbr.rel (%p197) target = $region24
      $region23: #{tpu_custom_call.1} parent=5 // pred_region
        // Predicated region
        $region25: #{tpu_custom_call.1} parent=23 // pred_check
          %p200 = pneg %p55
        $region26: #{tpu_custom_call.1} parent=23 // pred_check_branch
          %202 = sbr.rel (%p200) target = $region28
        $region27: #{tpu_custom_call.1} parent=23 // pred_region
          %s203 = sand.u32 %s45, 1
          %s204 = scalar_lea.sflag [#allocation3], %s203
          %s205 = sand.u32 %s45, 1
          %s206 = smul.addr %s205, 6
          %s207 = scalar_lea.vmem [#allocation2], %s206
          %s209 = ssub.s32 96, 96
          %210 = vsyncadd %s204, %s209
          %s211 = smul.addr %s28, 3
          %s212 = sadd.s32 %s29, %s211
          %s213 = smul.addr %s212, 32
          %s214 = scalar_lea.hbm %s0, %s213
          %s215 = sshll.u32 %s207, 4
          %s216 = int_to_ptr.vmem [resolvable:$true] %s215
          %221 = dma.hbm_to_vmem [thread:$0]  %s214, 96, %s216, %s204, 32, 32, 2
        $region28: #{tpu_custom_call.1} parent=23 // pred_fallthru
          _
        // Predicated region
        $region29: #{tpu_custom_call.1} parent=23 // pred_check
          %p222 = pneg %p83
        $region30: #{tpu_custom_call.1} parent=23 // pred_check_branch
          %224 = sbr.rel (%p222) target = $region32
        $region31: #{tpu_custom_call.1} parent=23 // pred_region
          %s225 = sand.u32 %s73, 1
          %s226 = scalar_lea.sflag [#allocation7], %s225
          %s227 = sand.u32 %s73, 1
          %s228 = smul.addr %s227, 2
          %s229 = scalar_lea.vmem [#allocation6], %s228
          %s231 = ssub.s32 32, 32
          %232 = vsyncadd %s226, %s231
          %s233 = sadd.s32 %s29, %s28
          %s234 = smul.addr %s233, 32
          %s235 = scalar_lea.hbm %s1, %s234
          %s237 = sshll.u32 %s229, 4
          %s238 = int_to_ptr.vmem [resolvable:$true] %s237
          %240 = dma.hbm_to_vmem [thread:$0]  %s235, 32, %s238, %s226
        $region32: #{tpu_custom_call.1} parent=23 // pred_fallthru
          _
      $region24: #{tpu_custom_call.1} parent=5 // pred_fallthru
        _
      %p241 = scmp.le.s32.totalorder 1, %s21
      %p242 = scmp.lt.s32.totalorder %s21, 3
      %p243 = pnand %p241, %p242
      %p244 = pneg %p243
      // Predicated region
      $region33: #{tpu_custom_call.1} parent=5 // pred_check
        _
      $region34: #{tpu_custom_call.1} parent=5 // pred_check_branch
        %246 = sbr.rel (%p243) target = $region36
      $region35: #{tpu_custom_call.1} parent=5 // pred_region
        %s247 = ssub.s32 %s21, 1
        %s248 = sand.u32 %s48, 1
        %s249 = scalar_lea.sflag [#allocation3], %s248
        %s250 = sand.u32 %s48, 1
        %s251 = smul.addr %s250, 6
        %s252 = scalar_lea.vmem [#allocation2], %s251
        // Predicated region
        $region37: #{tpu_custom_call.1} parent=35 // pred_check
          %p253 = pneg %p61
        $region38: #{tpu_custom_call.1} parent=35 // pred_check_branch
          %255 = sbr.rel (%p253) target = $region40
        $region39: #{tpu_custom_call.1} parent=35 // pred_region
          %256 = dma.done %s249, 96
        $region40: #{tpu_custom_call.1} parent=35 // pred_fallthru
          _
        %s257 = sand.u32 %s76, 1
        %s258 = scalar_lea.sflag [#allocation7], %s257
        %s259 = sand.u32 %s76, 1
        %s260 = smul.addr %s259, 2
        %s261 = scalar_lea.vmem [#allocation6], %s260
        // Predicated region
        $region41: #{tpu_custom_call.1} parent=35 // pred_check
          %p262 = pneg %p89
        $region42: #{tpu_custom_call.1} parent=35 // pred_check_branch
          %264 = sbr.rel (%p262) target = $region44
        $region43: #{tpu_custom_call.1} parent=35 // pred_region
          %265 = dma.done %s258, 32
        $region44: #{tpu_custom_call.1} parent=35 // pred_fallthru
          _
        // Predicated region
        $region45: #{tpu_custom_call.1} parent=35 // pred_check
          %p266 = pneg %p110
        $region46: #{tpu_custom_call.1} parent=35 // pred_check_branch
          %268 = sbr.rel (%p266) target = $region48
        $region47: #{tpu_custom_call.1} parent=35 // pred_region
          %269 = dma.done [#allocation5], 64
        $region48: #{tpu_custom_call.1} parent=35 // pred_fallthru
          _
        // Predicated region
        $region49: #{tpu_custom_call.1} parent=35 // pred_check
          %p270 = pneg %p131
        $region50: #{tpu_custom_call.1} parent=35 // pred_check_branch
          %272 = sbr.rel (%p270) target = $region52
        $region51: #{tpu_custom_call.1} parent=35 // pred_region
          %273 = dma.done [#allocation10], 16
        $region52: #{tpu_custom_call.1} parent=35 // pred_fallthru
          _
        %274 = sfence
        %s275 = sand.u32 %s48, 1
        %s276 = scalar_lea.sflag [#allocation3], %s275
        %s277 = sand.u32 %s48, 1
        %s278 = smul.addr %s277, 6
        %s279 = scalar_lea.vmem [#allocation2], %s278
        %p280 = pneg %p61
        %p281 = pneg %p58
        %s282 = sand.u32 %s76, 1
        %s283 = scalar_lea.sflag [#allocation7], %s282
        %s284 = sand.u32 %s76, 1
        %s285 = smul.addr %s284, 2
        %s286 = scalar_lea.vmem [#allocation6], %s285
        %p287 = pneg %p89
        %p288 = pneg %p86
        %p289 = pneg %p110
        %p290 = pneg %p107
        %p291 = pneg %p131
        %p292 = pneg %p128
        %p293 = pneg %p159
        %p294 = pneg %p156
        %s295 = sand.u32 %s146, 1
        %s296 = scalar_lea.sflag [#allocation4], %s295
        %s297 = sand.u32 %s146, 1
        %s298 = smul.addr %s297, 16
        %s299 = scalar_lea.vmem [#allocation11], %s298
        %s300 = sld [smem:[#allocation8]]
        %s301 = sld [smem:[#allocation8 + $0x1]]
        %s302 = sld [smem:[#allocation8 + $0x2]]
        %s303 = sld [smem:[#allocation8 + $0x3]]
        %s304 = sld [smem:[#allocation8 + $0x4]]
        %s305 = sld [smem:[#allocation8 + $0x5]]
        %s306 = sld [smem:[#allocation8 + $0x6]]
        %s307 = sld [smem:[#allocation8 + $0x7]]
        %s308 = sld [smem:[#allocation8 + $0x80]]
        %s309 = sld [smem:[#allocation8 + $0x81]]
        %s310 = sld [smem:[#allocation8 + $0x82]]
        %s311 = sld [smem:[#allocation8 + $0x83]]
        %s312 = sld [smem:[#allocation8 + $0x84]]
        %s313 = sld [smem:[#allocation8 + $0x85]]
        %s314 = sld [smem:[#allocation8 + $0x86]]
        %s315 = sld [smem:[#allocation8 + $0x87]]
        %s316 = sld [smem:[#allocation8 + $0x100]]
        %s317 = sld [smem:[#allocation8 + $0x101]]
        %s318 = sld [smem:[#allocation8 + $0x102]]
        %s319 = sld [smem:[#allocation8 + $0x103]]
        %s320 = sld [smem:[#allocation8 + $0x104]]
        %s321 = sld [smem:[#allocation8 + $0x105]]
        %s322 = sld [smem:[#allocation8 + $0x106]]
        %s323 = sld [smem:[#allocation8 + $0x107]]
        %s324 = sld [smem:[#allocation8 + $0x180]]
        %s325 = sld [smem:[#allocation8 + $0x181]]
        %s326 = sld [smem:[#allocation8 + $0x182]]
        %s327 = sld [smem:[#allocation8 + $0x183]]
        %s328 = sld [smem:[#allocation8 + $0x184]]
        %s329 = sld [smem:[#allocation8 + $0x185]]
        %s330 = sld [smem:[#allocation8 + $0x186]]
        %s331 = sld [smem:[#allocation8 + $0x187]]
        %s332 = sld [smem:[#allocation9]]
        %s333 = sld [smem:[#allocation9 + $0x1]]
        %s334 = sld [smem:[#allocation9 + $0x2]]
        %s335 = sld [smem:[#allocation9 + $0x3]]
        %s336 = sld [smem:[#allocation9 + $0x4]]
        %s337 = sld [smem:[#allocation9 + $0x5]]
        %s338 = sld [smem:[#allocation9 + $0x6]]
        %s339 = sld [smem:[#allocation9 + $0x7]]
        %v340 = vld [vmem:[%s252] sm:$0x3]
        %s341 = scalar_lea.vmem %s252, 2 [#allocation2]
        %v342 = vld [vmem:[%s341] sm:$0x3]
        %s343 = scalar_lea.vmem %s252, 4 [#allocation2]
        %v344 = vld [vmem:[%s343] sm:$0x3]
        %v345 = vld [vmem:[%s261] sm:$0x3]
        %v346 = vstv %s300
        %v347 = vmul.f32 %v340, %v346
        %v348 = vstv %s332
        %v349 = vadd.f32 %v347, %v348
        %v350 = vstv %s308
        %v351 = vmul.f32 %v342, %v350
        %v352 = vadd.f32 %v349, %v351
        %v353 = vstv %s316
        %v354 = vmul.f32 %v344, %v353
        %v355 = vadd.f32 %v352, %v354
        %v356 = vstv %s324
        %v357 = vmul.f32 %v345, %v356
        %v358 = vadd.f32 %v355, %v357
        %v359 = vstv %s301
        %v360 = vmul.f32 %v340, %v359
        %v361 = vstv %s333
        %v362 = vadd.f32 %v360, %v361
        %v363 = vstv %s309
        %v364 = vmul.f32 %v342, %v363
        %v365 = vadd.f32 %v362, %v364
        %v366 = vstv %s317
        %v367 = vmul.f32 %v344, %v366
        %v368 = vadd.f32 %v365, %v367
        %v369 = vstv %s325
        %v370 = vmul.f32 %v345, %v369
        %v371 = vadd.f32 %v368, %v370
        %v372 = vstv %s302
        %v373 = vmul.f32 %v340, %v372
        %v374 = vstv %s334
        %v375 = vadd.f32 %v373, %v374
        %v376 = vstv %s310
        %v377 = vmul.f32 %v342, %v376
        %v378 = vadd.f32 %v375, %v377
        %v379 = vstv %s318
        %v380 = vmul.f32 %v344, %v379
        %v381 = vadd.f32 %v378, %v380
        %v382 = vstv %s326
        %v383 = vmul.f32 %v345, %v382
        %v384 = vadd.f32 %v381, %v383
        %v385 = vstv %s303
        %v386 = vmul.f32 %v340, %v385
        %v387 = vstv %s335
        %v388 = vadd.f32 %v386, %v387
        %v389 = vstv %s311
        %v390 = vmul.f32 %v342, %v389
        %v391 = vadd.f32 %v388, %v390
        %v392 = vstv %s319
        %v393 = vmul.f32 %v344, %v392
        %v394 = vadd.f32 %v391, %v393
        %v395 = vstv %s327
        %v396 = vmul.f32 %v345, %v395
        %v397 = vadd.f32 %v394, %v396
        %v398 = vstv %s304
        %v399 = vmul.f32 %v340, %v398
        %v400 = vstv %s336
        %v401 = vadd.f32 %v399, %v400
        %v402 = vstv %s312
        %v403 = vmul.f32 %v342, %v402
        %v404 = vadd.f32 %v401, %v403
        %v405 = vstv %s320
        %v406 = vmul.f32 %v344, %v405
        %v407 = vadd.f32 %v404, %v406
        %v408 = vstv %s328
        %v409 = vmul.f32 %v345, %v408
        %v410 = vadd.f32 %v407, %v409
        %v411 = vstv %s305
        %v412 = vmul.f32 %v340, %v411
        %v413 = vstv %s337
        %v414 = vadd.f32 %v412, %v413
        %v415 = vstv %s313
        %v416 = vmul.f32 %v342, %v415
        %v417 = vadd.f32 %v414, %v416
        %v418 = vstv %s321
        %v419 = vmul.f32 %v344, %v418
        %v420 = vadd.f32 %v417, %v419
        %v421 = vstv %s329
        %v422 = vmul.f32 %v345, %v421
        %v423 = vadd.f32 %v420, %v422
        %v424 = vstv %s306
        %v425 = vmul.f32 %v340, %v424
        %v426 = vstv %s338
        %v427 = vadd.f32 %v425, %v426
        %v428 = vstv %s314
        %v429 = vmul.f32 %v342, %v428
        %v430 = vadd.f32 %v427, %v429
        %v431 = vstv %s322
        %v432 = vmul.f32 %v344, %v431
        %v433 = vadd.f32 %v430, %v432
        %v434 = vstv %s330
        %v435 = vmul.f32 %v345, %v434
        %v436 = vadd.f32 %v433, %v435
        %v437 = vstv %s307
        %v438 = vmul.f32 %v340, %v437
        %v439 = vstv %s339
        %v440 = vadd.f32 %v438, %v439
        %v441 = vstv %s315
        %v442 = vmul.f32 %v342, %v441
        %v443 = vadd.f32 %v440, %v442
        %v444 = vstv %s323
        %v445 = vmul.f32 %v344, %v444
        %v446 = vadd.f32 %v443, %v445
        %v447 = vstv %s331
        %v448 = vmul.f32 %v345, %v447
        %v449 = vadd.f32 %v446, %v448
        %v450 = vmul.f32 %v358, %v358
        %v451 = vmul.f32 %v371, %v371
        %v452 = vadd.f32 %v450, %v451
        %v453 = vmul.f32 %v384, %v384
        %v454 = vadd.f32 %v452, %v453
        %v455 = vmul.f32 %v397, %v397
        %v456 = vadd.f32 %v454, %v455
        %v457 = vmul.f32 %v410, %v410
        %v458 = vadd.f32 %v456, %v457
        %v459 = vmul.f32 %v423, %v423
        %v460 = vadd.f32 %v458, %v459
        %v461 = vmul.f32 %v436, %v436
        %v462 = vadd.f32 %v460, %v461
        %v463 = vmul.f32 %v449, %v449
        %v464 = vadd.f32 %v462, %v463
        %v465 = vadd.f32 %v464, 1e-12
        %v466 = vrsqrt.pop %v465
        %v467 = vmul.f32 %v358, %v466
        %v468 = vmul.f32 %v371, %v466
        %v469 = vmul.f32 %v384, %v466
        %v470 = vmul.f32 %v397, %v466
        %v471 = vmul.f32 %v410, %v466
        %v472 = vmul.f32 %v423, %v466
        %v473 = vmul.f32 %v436, %v466
        %v474 = vmul.f32 %v449, %v466
        %475 = vst [vmem:[%s299] sm:$0x3] %v467
        %s476 = scalar_lea.vmem %s299, 2 [#allocation11]
        %477 = vst [vmem:[%s476] sm:$0x3] %v468
        %s478 = scalar_lea.vmem %s299, 4 [#allocation11]
        %479 = vst [vmem:[%s478] sm:$0x3] %v469
        %s480 = scalar_lea.vmem %s299, 6 [#allocation11]
        %481 = vst [vmem:[%s480] sm:$0x3] %v470
        %s482 = scalar_lea.vmem %s299, 8 [#allocation11]
        %483 = vst [vmem:[%s482] sm:$0x3] %v471
        %s484 = scalar_lea.vmem %s299, 10 [#allocation11]
        %485 = vst [vmem:[%s484] sm:$0x3] %v472
        %s486 = scalar_lea.vmem %s299, 12 [#allocation11]
        %487 = vst [vmem:[%s486] sm:$0x3] %v473
        %s488 = scalar_lea.vmem %s299, 14 [#allocation11]
        %489 = vst [vmem:[%s488] sm:$0x3] %v474
        %s490 = sand.u32 %s146, 1
        %s491 = scalar_lea.sflag [#allocation4], %s490
        %s492 = sand.u32 %s146, 1
        %s493 = smul.addr %s492, 16
        %s494 = scalar_lea.vmem [#allocation11], %s493
        // Predicated region
        $region53: #{tpu_custom_call.1} parent=35 // pred_check
          %p495 = pneg %p156
        $region54: #{tpu_custom_call.1} parent=35 // pred_check_branch
          %497 = sbr.rel (%p495) target = $region56
        $region55: #{tpu_custom_call.1} parent=35 // pred_region
          %s499 = ssub.s32 256, 256
          %500 = vsyncadd %s491, %s499
          %s501 = smul.addr %s30, 8
          %s502 = sadd.s32 %s31, %s501
          %s503 = smul.addr %s502, 32
          %s504 = scalar_lea.hbm %s4, %s503
          %s505 = sshll.u32 %s494, 4
          %s506 = int_to_ptr.vmem [resolvable:$true] %s505
          %511 = dma.vmem_to_hbm [thread:$0]  %s506, 256, %s504, %s491, 32, 32, 2
        $region56: #{tpu_custom_call.1} parent=35 // pred_fallthru
          _
      $region36: #{tpu_custom_call.1} parent=5 // pred_fallthru
        _
      %p512 = scmp.le.s32.totalorder 2, %s21
      // Predicated region
      $region57: #{tpu_custom_call.1} parent=5 // pred_check
        %p513 = pneg %p512
      $region58: #{tpu_custom_call.1} parent=5 // pred_check_branch
        %515 = sbr.rel (%p513) target = $region60
      $region59: #{tpu_custom_call.1} parent=5 // pred_region
        %s516 = ssub.s32 %s21, 2
        // Predicated region
        $region61: #{tpu_custom_call.1} parent=59 // pred_check
          %p517 = pneg %p162
        $region62: #{tpu_custom_call.1} parent=59 // pred_check_branch
          %519 = sbr.rel (%p517) target = $region64
        $region63: #{tpu_custom_call.1} parent=59 // pred_region
          %s520 = sand.u32 %s147, 1
          %s521 = scalar_lea.sflag [#allocation4], %s520
          %s522 = sand.u32 %s147, 1
          %s523 = smul.addr %s522, 16
          %s524 = scalar_lea.vmem [#allocation11], %s523
          %525 = dma.done %s521, 256
        $region64: #{tpu_custom_call.1} parent=59 // pred_fallthru
          _
      $region60: #{tpu_custom_call.1} parent=5 // pred_fallthru
        _
    $region6: #{tpu_custom_call.1} parent=1 // loop_footer
      %s25 = sadd.s32 1, %s21
    $region7: #{tpu_custom_call.1} parent=1 // loop_footer_branch
      %20 = sbr.rel target = $region3
    $region8: #{tpu_custom_call.1} parent=1 // loop_exit
      _
    %526 = vsyncpa [#allocation3], 1
    %s527 = scalar_lea.sflag [#allocation3], 1
    %528 = vsyncpa %s527, 1
    %529 = vsyncpa [#allocation7], 1
    %s530 = scalar_lea.sflag [#allocation7], 1
    %531 = vsyncpa %s530, 1
    %532 = vsyncpa [#allocation4], 1
    %s533 = scalar_lea.sflag [#allocation4], 1
    %534 = vsyncpa %s533, 1
    %535 = vsyncpa [#allocation5], 1
    %s536 = scalar_lea.sflag [#allocation5], 1
    %537 = vsyncpa %s536, 1
    %538 = vsyncpa [#allocation10], 1

</llo_original>
